<compile_context>
chip_gen: v6e
topology: v6e:2x2x1
jax: 0.10.0
libtpu: 0.0.40
codegen_flags: <defaults>
</compile_context>

<pallas_src>
import jax
import jax.numpy as jnp
from jax import lax
from jax.experimental import pallas as pl
from jax.experimental.pallas import tpu as pltpu


# ---------------------------------------------------------------------------
# Kernel 1: fused token-wise projections
#   y = x @ [w_pair_a | w_pair_b | w_single] + [b_a | b_b + b_relpos | b_single]
# emitted as three separate outputs (lane-aligned in-kernel slices).
# ---------------------------------------------------------------------------
def _proj_kernel(x_ref, w_ref, bias_ref, a_ref, b_ref, single_ref):
    P = a_ref.shape[1]
    S = single_ref.shape[1]
    y = (
        jnp.dot(
            x_ref[...],
            w_ref[...],
            preferred_element_type=jnp.float32,
            precision=jax.lax.Precision.HIGHEST,
        )
        + bias_ref[...]
    )
    # P is a multiple of 128 in practice -> these slices are lane-aligned.
    a_ref[...] = y[:, :P]
    b_ref[...] = y[:, P:2 * P]
    single_ref[...] = y[:, 2 * P:2 * P + S]


# ---------------------------------------------------------------------------
# Kernel 2: tiled pair build   pair[i, j, :] = a[i] + b[j] + rel_table[bin(i - j)]
# relpos lookup = per-chunk one-hot (exact 0/1, f32) x table MXU matmul.
# ---------------------------------------------------------------------------
def _pair_kernel(res_i_ref, res_j_ref, a_ref, b_ref, table_ref, out_ref):
    K, P = table_ref.shape
    n_bins = (K - 1) // 2
    TI, TJ, _ = out_ref.shape

    table = table_ref[...]            # [K, P] f32, tiny (relpos bias already folded into b)
    res_j = res_j_ref[...]            # [1, TJ] int32
    b_row = b_ref[...][None, :, :]    # [1, TJ, P]  (hoisted; broadcast happens in the add)

    # Row-chunking bounds the one-hot / rel temporaries to ~CH*TJ*(K_pad + P)*4 bytes
    # so only the double-buffered output block dominates VMEM (v7x 64 MiB safe).
    if TI % 16 == 0:
        CH = 16
    elif TI % 8 == 0:
        CH = 8
    else:
        CH = TI
    n_chunks = TI // CH

    # iota over K in the (rows, K) layout of the chunked one-hot (hoisted out of the loop).
    k_iota = lax.broadcasted_iota(jnp.int32, (CH, TJ, K), 2)

    def chunk(c, carry):
        r0 = pl.multiple_of(c * CH, CH)
        # relative-position bin for every (i, j) of this chunk, natural [CH, TJ] layout
        d = jnp.clip(res_i_ref[pl.ds(r0, CH), :] - res_j, -n_bins, n_bins) + n_bins
        onehot = (d[:, :, None] == k_iota).astype(jnp.float32)         # [CH, TJ, K], exact
        rel = lax.dot_general(
            onehot.reshape(CH * TJ, K),
            table,
            dimension_numbers=(((1,), (0,)), ((), ())),
            preferred_element_type=jnp.float32,
            precision=jax.lax.Precision.HIGHEST,
        ).reshape(CH, TJ, P)                                            # [CH, TJ, P]
        a_c = a_ref[pl.ds(r0, CH), :]                                   # [CH, P]
        # single fused expression straight into the output block (no extra [CH,TJ,P] temps)
        out_ref[pl.ds(r0, CH), :, :] = a_c[:, None, :] + b_row + rel
        return carry

    lax.fori_loop(0, n_chunks, chunk, 0)


# ---------------------------------------------------------------------------
# Wrapper
# ---------------------------------------------------------------------------
def nanofold_input(input_emb, residue_index, params):
    N, E = input_emb.shape
    S = params["w_single"].shape[1]
    P = params["w_pair_a"].shape[1]
    K = params["w_relpos"].shape[0]
    f32 = jnp.float32

    x = input_emb.astype(f32)

    # --- fuse the three projections into one matmul; fold all biases once ----
    # order [a | b | single] keeps the in-kernel output slices 128-lane aligned (P = 128).
    w_fused = jnp.concatenate(
        [params["w_pair_a"], params["w_pair_b"], params["w_single"]], axis=1
    )                                                                 # [E, 2P + S]
    b_fused = jnp.concatenate(
        [params["b_pair_a"],
         params["b_pair_b"] + params["b_relpos"],                     # fold relpos bias into b
         params["b_single"]],
        axis=0,
    ).reshape(1, 2 * P + S)

    TN = min(512, N)
    a_proj, b_proj, single = pl.pallas_call(
        _proj_kernel,
        grid=(pl.cdiv(N, TN),),
        in_specs=[
            pl.BlockSpec((TN, E), lambda t: (t, 0)),
            pl.BlockSpec((E, 2 * P + S), lambda t: (0, 0)),
            pl.BlockSpec((1, 2 * P + S), lambda t: (0, 0)),
        ],
        out_specs=[
            pl.BlockSpec((TN, P), lambda t: (t, 0)),
            pl.BlockSpec((TN, P), lambda t: (t, 0)),
            pl.BlockSpec((TN, S), lambda t: (t, 0)),
        ],
        out_shape=(
            jax.ShapeDtypeStruct((N, P), f32),
            jax.ShapeDtypeStruct((N, P), f32),
            jax.ShapeDtypeStruct((N, S), f32),
        ),
        compiler_params=pltpu.CompilerParams(
            dimension_semantics=("parallel",),
        ),
    )(x, w_fused, b_fused)

    # --- tiled pair build -----------------------------------------------------
    res_col = residue_index.reshape(N, 1).astype(jnp.int32)   # row index i
    res_row = residue_index.reshape(1, N).astype(jnp.int32)   # col index j
    rel_table = params["w_relpos"].astype(f32)                # [K, P] (bias already folded)

    TI = min(128, N)
    TJ = min(128, N)

    pair = pl.pallas_call(
        _pair_kernel,
        grid=(pl.cdiv(N, TI), pl.cdiv(N, TJ)),
        in_specs=[
            pl.BlockSpec((TI, 1), lambda i, j: (i, 0)),     # residue index (rows)
            pl.BlockSpec((1, TJ), lambda i, j: (0, j)),     # residue index (cols)
            pl.BlockSpec((TI, P), lambda i, j: (i, 0)),     # a(x_i)
            pl.BlockSpec((TJ, P), lambda i, j: (j, 0)),     # b(x_j)
            pl.BlockSpec((K, P), lambda i, j: (0, 0)),      # relpos table
        ],
        out_specs=pl.BlockSpec((TI, TJ, P), lambda i, j: (i, j, 0)),
        out_shape=jax.ShapeDtypeStruct((N, N, P), f32),
        compiler_params=pltpu.CompilerParams(
            dimension_semantics=("parallel", "parallel"),
            vmem_limit_bytes=32 * 1024 * 1024,
        ),
    )(res_col, res_row, a_proj, b_proj, rel_table)

    # The module's first output is the input embedding itself: return it directly
    # (no HBM->VMEM->HBM passthrough).
    return x, single, pair


# ---------------------------------------------------------------------------
# Pure-JAX reference (mirrors the PyTorch forward) for correctness checking
# ---------------------------------------------------------------------------
def nanofold_input_ref(input_emb, residue_index, params):
    hi = jax.lax.Precision.HIGHEST
    x = input_emb.astype(jnp.float32)
    single = jnp.dot(x, params["w_single"], precision=hi) + params["b_single"]
    a = jnp.dot(x, params["w_pair_a"], precision=hi) + params["b_pair_a"]
    b = jnp.dot(x, params["w_pair_b"], precision=hi) + params["b_pair_b"]
    K = params["w_relpos"].shape[0]
    n_bins = (K - 1) // 2
    diff = residue_index[:, None] - residue_index[None, :]
    d = jnp.clip(diff, -n_bins, n_bins) + n_bins
    onehot = jax.nn.one_hot(d, K, dtype=jnp.float32)
    rel = jnp.dot(onehot, params["w_relpos"], precision=hi) + params["b_relpos"]
    pair = a[:, None, :] + b[None, :, :] + rel
    return x, single, pair


def make_params(key, input_embedding_size, single_embedding_size,
                pair_embedding_size, position_bins):
    E, S, P = input_embedding_size, single_embedding_size, pair_embedding_size
    K = 2 * position_bins + 1
    ks = jax.random.split(key, 8)
    scale = 0.1
    return {
        "w_single": scale * jax.random.normal(ks[0], (E, S), jnp.float32),
        "b_single": scale * jax.random.normal(ks[1], (S,), jnp.float32),
        "w_pair_a": scale * jax.random.normal(ks[2], (E, P), jnp.float32),
        "b_pair_a": scale * jax.random.normal(ks[3], (P,), jnp.float32),
        "w_pair_b": scale * jax.random.normal(ks[4], (E, P), jnp.float32),
        "b_pair_b": scale * jax.random.normal(ks[5], (P,), jnp.float32),
        "w_relpos": scale * jax.random.normal(ks[6], (K, P), jnp.float32),
        "b_relpos": scale * jax.random.normal(ks[7], (P,), jnp.float32),
    }


if __name__ == "__main__":
    # Small, module-consistent shapes. P = 128 (canonical pair width) keeps the pair
    # output lane-dense (full 128-lane stores).
    N = 8                      # number of tokens (seq)
    E = 32                     # input_embedding_size (output width of InputEmbedding)
    S = 32                     # single_embedding_size
    P = 128                    # pair_embedding_size
    position_bins = 4          # -> 2*bins+1 = 9 relative-position bins

    key = jax.random.PRNGKey(0)
    k_emb, k_idx, k_par = jax.random.split(key, 3)

    # Stand-in for the InputEmbedding output (see TODO(synk) above).
    input_emb = jax.random.normal(k_emb, (N, E), jnp.float32)
    # Non-trivial residue indices (with a gap) to exercise the relpos clipping.
    residue_index = jnp.array([0, 1, 2, 3, 10, 11, 12, 13], dtype=jnp.int32)

    params = make_params(k_par, E, S, P, position_bins)

    out = nanofold_input(input_emb, residue_index, params)
    out = jax.block_until_ready(out)

    ref = nanofold_input_ref(input_emb, residue_index, params)
    for got, want in zip(out, ref):
        assert got.shape == want.shape and got.dtype == want.dtype
        assert jnp.allclose(got, want, atol=1e-4, rtol=1e-4), "mismatch vs reference"

    print("KERNEL_OK")
</pallas_src>

<mosaic_0001>
module attributes {stable_mosaic.version = 11 : i64} {
  func.func @_proj_kernel(%arg0: i32, %arg1: memref<8x32xf32, #tpu.memory_space<vmem>>, %arg2: memref<32x288xf32, #tpu.memory_space<vmem>>, %arg3: memref<1x288xf32, #tpu.memory_space<vmem>>, %arg4: memref<8x128xf32, #tpu.memory_space<vmem>>, %arg5: memref<8x128xf32, #tpu.memory_space<vmem>>, %arg6: memref<8x32xf32, #tpu.memory_space<vmem>>) attributes {dimension_semantics = [#tpu.dimension_semantics<parallel>], iteration_bounds = array<i64: 1>, scalar_prefetch = 0 : i64, scratch_operands = 0 : i64, tpu.core_type = #tpu.core_type<tc>, window_params = [{transform_indices = @transform_0, window_bounds = array<i64: 8, 32>}, {pipeline_mode = #tpu.pipeline_mode<synchronous>, transform_indices = @transform_1, window_bounds = array<i64: 32, 288>}, {pipeline_mode = #tpu.pipeline_mode<synchronous>, transform_indices = @transform_2, window_bounds = array<i64: 1, 288>}, {transform_indices = @transform_3, window_bounds = array<i64: 8, 128>}, {transform_indices = @transform_4, window_bounds = array<i64: 8, 128>}, {transform_indices = @transform_5, window_bounds = array<i64: 8, 32>}]} {
    %c0 = arith.constant 0 : index
    %c0_0 = arith.constant 0 : index
    %0 = vector.load %arg1[%c0, %c0_0] : memref<8x32xf32, #tpu.memory_space<vmem>>, vector<8x32xf32>
    %c0_1 = arith.constant 0 : index
    %c0_2 = arith.constant 0 : index
    %1 = vector.load %arg2[%c0_1, %c0_2] : memref<32x288xf32, #tpu.memory_space<vmem>>, vector<32x288xf32>
    %cst = arith.constant dense<0.000000e+00> : vector<8x288xf32>
    %2 = tpu.matmul %0, %1, %cst {dimension_numbers = #tpu.dot_dimension_numbers<[1], [0], [0], [1], [0, 0, 1, 1], [], []>, precision = #tpu.contract_precision<fp32>} : vector<8x32xf32>, vector<32x288xf32>, vector<8x288xf32> -> vector<8x288xf32>
    %c0_3 = arith.constant 0 : index
    %c0_4 = arith.constant 0 : index
    %3 = vector.load %arg3[%c0_3, %c0_4] : memref<1x288xf32, #tpu.memory_space<vmem>>, vector<1x288xf32>
    %4 = vector.broadcast %3 : vector<1x288xf32> to vector<8x288xf32>
    %5 = arith.addf %2, %4 : vector<8x288xf32>
    %6 = vector.extract_strided_slice %5 {offsets = [0, 0], sizes = [8, 128], strides = [1, 1]} : vector<8x288xf32> to vector<8x128xf32>
    %c0_5 = arith.constant 0 : index
    %c0_6 = arith.constant 0 : index
    %7 = vector.load %arg4[%c0_5, %c0_6] : memref<8x128xf32, #tpu.memory_space<vmem>>, vector<8x128xf32>
    tpu.vector_store %arg4[%c0_5, %c0_6], %6 {strides = array<i32>} : memref<8x128xf32, #tpu.memory_space<vmem>>, vector<8x128xf32>,
    %8 = vector.extract_strided_slice %5 {offsets = [0, 128], sizes = [8, 128], strides = [1, 1]} : vector<8x288xf32> to vector<8x128xf32>
    %c0_7 = arith.constant 0 : index
    %c0_8 = arith.constant 0 : index
    %9 = vector.load %arg5[%c0_7, %c0_8] : memref<8x128xf32, #tpu.memory_space<vmem>>, vector<8x128xf32>
    tpu.vector_store %arg5[%c0_7, %c0_8], %8 {strides = array<i32>} : memref<8x128xf32, #tpu.memory_space<vmem>>, vector<8x128xf32>,
    %10 = vector.extract_strided_slice %5 {offsets = [0, 256], sizes = [8, 32], strides = [1, 1]} : vector<8x288xf32> to vector<8x32xf32>
    %c0_9 = arith.constant 0 : index
    %c0_10 = arith.constant 0 : index
    %11 = vector.load %arg6[%c0_9, %c0_10] : memref<8x32xf32, #tpu.memory_space<vmem>>, vector<8x32xf32>
    tpu.vector_store %arg6[%c0_9, %c0_10], %10 {strides = array<i32>} : memref<8x32xf32, #tpu.memory_space<vmem>>, vector<8x32xf32>,
    return
  }
  func.func @transform_0(%arg0: i32) -> (i32, i32) {
    %c0_i32 = arith.constant 0 : i32
    %c0_i32_0 = arith.constant 0 : i32
    return %arg0, %c0_i32 : i32, i32
  }
  func.func @transform_1(%arg0: i32) -> (i32, i32) {
    %c0_i32 = arith.constant 0 : i32
    %c0_i32_0 = arith.constant 0 : i32
    %c0_i32_1 = arith.constant 0 : i32
    return %c0_i32, %c0_i32_0 : i32, i32
  }
  func.func @transform_2(%arg0: i32) -> (i32, i32) {
    %c0_i32 = arith.constant 0 : i32
    %c0_i32_0 = arith.constant 0 : i32
    %c0_i32_1 = arith.constant 0 : i32
    return %c0_i32, %c0_i32_0 : i32, i32
  }
  func.func @transform_3(%arg0: i32) -> (i32, i32) {
    %c0_i32 = arith.constant 0 : i32
    %c0_i32_0 = arith.constant 0 : i32
    return %arg0, %c0_i32 : i32, i32
  }
  func.func @transform_4(%arg0: i32) -> (i32, i32) {
    %c0_i32 = arith.constant 0 : i32
    %c0_i32_0 = arith.constant 0 : i32
    return %arg0, %c0_i32 : i32, i32
  }
  func.func @transform_5(%arg0: i32) -> (i32, i32) {
    %c0_i32 = arith.constant 0 : i32
    %c0_i32_0 = arith.constant 0 : i32
    return %arg0, %c0_i32 : i32, i32
  }
}

</mosaic_0001>

<llo_original>
// kernel: tpu_custom_call.1
$region0: #{tpu_custom_call.1}
  #allocation0 [shape = 'u32[]', space=smem, size = 0x4, offset = 0x4, fixed_abs, tag = 'smem constant byte address 0x4 - core index']
  #allocation1 [shape = 'u32[144,128]{1,0:T(1,128)}', space=vmem, size = 0x12000, scoped, tag = 'internal scratch']
  %s0 = inlined_call_operand.hbm [shape: f32[8,32], index: 0, kind: input, shape index: {}]
  %s1 = inlined_call_operand.hbm [shape: f32[32,288], index: 1, kind: input, shape index: {}]
  %s2 = inlined_call_operand.vmem [shape: f32[1,288], index: 2, kind: input, shape index: {}]
  %s3 = inlined_call_operand.hbm [shape: f32[8,128], index: 3, kind: output, shape index: {0}]
  %s4 = inlined_call_operand.hbm [shape: f32[8,128], index: 4, kind: output, shape index: {1}]
  %s5 = inlined_call_operand.hbm [shape: f32[8,32], index: 5, kind: output, shape index: {2}]
  %6 = xla_tuple %s3, %s4, %s5
  %s7 = sld [smem:[#allocation0]]
  $region46: #{tpu_custom_call.1} parent=0
    _
  %s9 = ssub.s32 1, %s7
  %s10 = scalar_select 0, %s9, %s7
  $region1: #{tpu_custom_call.1} parent=0
    #allocation2 [shape = 'u8[4096]{0}', space=vmem, size = 0x1000, scoped, tag = 'input window, operand 0, single buffered']
    #allocation3 [shape = 's32[1]{0}', space=sflag, size = 0x4, scoped, tag = 'scoped memory for tpu_custom_call.1']
    #allocation4 [shape = 's32[1]{0}', space=sflag, size = 0x4, scoped, tag = 'scoped memory for tpu_custom_call.1']
    #allocation5 [shape = 'u8[49152]{0}', space=vmem, size = 0xc000, scoped, tag = 'input window, operand 1, single buffered']
    #allocation6 [shape = 's32[1]{0}', space=sflag, size = 0x4, scoped, tag = 'scoped memory for tpu_custom_call.1']
    #allocation7 [shape = 'u8[4096]{0}', space=vmem, size = 0x1000, scoped, tag = 'output window, operand 0, single buffered']
    #allocation8 [shape = 'u8[4096]{0}', space=vmem, size = 0x1000, scoped, tag = 'output window, operand 1, single buffered']
    #allocation9 [shape = 's32[1]{0}', space=sflag, size = 0x4, scoped, tag = 'scoped memory for tpu_custom_call.1']
    #allocation10 [shape = 'u8[4096]{0}', space=vmem, size = 0x1000, scoped, tag = 'output window, operand 2, single buffered']
    %11 = vsyncpa [#allocation3], 0
    %12 = vsyncpa [#allocation6], 0
    %13 = vsyncpa [#allocation4], 0
    %14 = vsyncpa [#allocation9], 0
    // Predicated region
    $region2: #{tpu_custom_call.1} parent=1 // pred_check
      _
    $region3: #{tpu_custom_call.1} parent=1 // pred_check_branch
      %16 = sbr.rel (0) target = $region5
    $region4: #{tpu_custom_call.1} parent=1 // pred_region
      %s18 = ssub.s32 128, 128
      %19 = vsyncadd [#allocation3], %s18
      %s21 = sshll.u32 [#allocation2], 4
      %s22 = int_to_ptr.vmem [resolvable:$true] %s21
      %24 = dma.hbm_to_vmem [thread:$0]  %s0, 128, %s22, [#allocation3]
    $region5: #{tpu_custom_call.1} parent=1 // pred_fallthru
      _
    // Predicated region
    $region6: #{tpu_custom_call.1} parent=1 // pred_check
      _
    $region7: #{tpu_custom_call.1} parent=1 // pred_check_branch
      %26 = sbr.rel (0) target = $region9
    $region8: #{tpu_custom_call.1} parent=1 // pred_region
      %s28 = ssub.s32 1536, 1536
      %29 = vsyncadd [#allocation6], %s28
      %s30 = sshll.u32 [#allocation5], 4
      %s31 = int_to_ptr.vmem [resolvable:$true] %s30
      %36 = dma.hbm_to_vmem [thread:$0]  %s1, 1536, %s31, [#allocation6], 384, 384, 24
    $region9: #{tpu_custom_call.1} parent=1 // pred_fallthru
      _
    // Predicated region
    $region10: #{tpu_custom_call.1} parent=1 // pred_check
      _
    $region11: #{tpu_custom_call.1} parent=1 // pred_check_branch
      %38 = sbr.rel (0) target = $region13
    $region12: #{tpu_custom_call.1} parent=1 // pred_region
      _
    $region13: #{tpu_custom_call.1} parent=1 // pred_fallthru
      _
    // Predicated region
    $region14: #{tpu_custom_call.1} parent=1 // pred_check
      _
    $region15: #{tpu_custom_call.1} parent=1 // pred_check_branch
      %40 = sbr.rel (0) target = $region17
    $region16: #{tpu_custom_call.1} parent=1 // pred_region
      %41 = dma.done [#allocation3], 128
    $region17: #{tpu_custom_call.1} parent=1 // pred_fallthru
      _
    // Predicated region
    $region18: #{tpu_custom_call.1} parent=1 // pred_check
      _
    $region19: #{tpu_custom_call.1} parent=1 // pred_check_branch
      %43 = sbr.rel (0) target = $region21
    $region20: #{tpu_custom_call.1} parent=1 // pred_region
      %44 = dma.done [#allocation6], 1536
    $region21: #{tpu_custom_call.1} parent=1 // pred_fallthru
      _
    %v45 = vld [vmem:[#allocation2] sm:$0xff]
    %v46 = vld [vmem:[#allocation5] sm:$0xff]
    %v47 = vld [vmem:[#allocation5 + $0x8] sm:$0xff]
    %v48 = vld [vmem:[#allocation5 + $0x10] sm:$0xff]
    %v49 = vld [vmem:[#allocation5 + $0x18] sm:$0xff]
    %v50 = vld [vmem:[#allocation5 + $0x20] sm:$0xff]
    %v51 = vld [vmem:[#allocation5 + $0x28] sm:$0xff]
    %v52 = vld [vmem:[#allocation5 + $0x30] sm:$0xff]
    %v53 = vld [vmem:[#allocation5 + $0x38] sm:$0xff]
    %v54 = vld [vmem:[#allocation5 + $0x40] sm:$0xff]
    %v55 = vld [vmem:[#allocation5 + $0x48] sm:$0xff]
    %v56 = vld [vmem:[#allocation5 + $0x50] sm:$0xff]
    %v57 = vld [vmem:[#allocation5 + $0x58] sm:$0xff]
    %v58 = vld [vmem:[%s2] sm:$0x7]
    %v60 = vlaneseq
    %v61 = vshrl.u32 %v60, 7
    %v62 = vsub.s32 0, %v61
    %v63 = vrot.slane %v58, %v62
    %v64 = vlaneseq
    %v65 = vshrl.u32 %v64, 7
    %v66 = vsub.s32 1, %v65
    %v67 = vrot.slane %v58, %v66
    %v68 = vlaneseq
    %v69 = vshrl.u32 %v68, 7
    %v70 = vsub.s32 2, %v69
    %v71 = vrot.slane %v58, %v70
    %vm75 = vcmask 261120
    %v77 = vsel %vm75, %v45, 0
    %79 = vmatprep.subr.mxu0 0.0
    %80 = vmatpush1.msra.mxu0 0.0
    %81 = vmatprep.subr.mxu0 0.0
    %82 = vmatpush1.msra.mxu0 0.0
    %83 = vmatprep.subr.mxu0 0.0
    %84 = vmatpush1.msra.mxu0 0.0
    %85 = vmatprep.subr.mxu0 0.0
    %86 = vmatpush1.msra.mxu0 0.0
    %87 = vmatprep.subr.mxu0 0.0
    %88 = vmatpush1.msra.mxu0 0.0
    %89 = vmatprep.subr.mxu0 0.0
    %90 = vmatpush1.msra.mxu0 0.0
    %91 = vmatprep.subr.mxu0 0.0
    %92 = vmatpush1.msra.mxu0 0.0
    %93 = vmatprep.subr.mxu0 0.0
    %94 = vmatpush1.msra.mxu0 0.0
    %95 = vmatprep.subr.mxu0 0.0
    %96 = vmatpush1.msra.mxu0 0.0
    %97 = vmatprep.subr.mxu0 0.0
    %98 = vmatpush1.msra.mxu0 0.0
    %99 = vmatprep.subr.mxu0 0.0
    %100 = vmatpush1.msra.mxu0 0.0
    %101 = vmatprep.subr.mxu0 0.0
    %102 = vmatpush1.msra.mxu0 0.0
    %v103 = vand.u32 %v56, 4294901760
    %104 = vmatprep.subr.mxu0 %v103
    %v105 = vand.u32 %v55, 4294901760
    %106 = vmatpush1.msra.mxu0 %v105
    %v107 = vand.u32 %v53, 4294901760
    %108 = vmatprep.subr.mxu0 %v107
    %v109 = vand.u32 %v52, 4294901760
    %110 = vmatpush1.msra.mxu0 %v109
    %v111 = vand.u32 %v50, 4294901760
    %112 = vmatprep.subr.mxu0 %v111
    %v113 = vand.u32 %v49, 4294901760
    %114 = vmatpush1.msra.mxu0 %v113
    %v115 = vand.u32 %v47, 4294901760
    %116 = vmatprep.subr.mxu0 %v115
    %v117 = vand.u32 %v46, 4294901760
    %118 = vmatpush1.msra.mxu0 %v117
    %119 = vmatprep.subr.mxu0 0.0
    %120 = vmatpush2.msra.mxu0 0.0
    %121 = vmatprep.subr.mxu0 0.0
    %122 = vmatpush2.msra.mxu0 0.0
    %123 = vmatprep.subr.mxu0 0.0
    %124 = vmatpush2.msra.mxu0 0.0
    %125 = vmatprep.subr.mxu0 0.0
    %126 = vmatpush2.msra.mxu0 0.0
    %127 = vmatprep.subr.mxu0 0.0
    %128 = vmatpush2.msra.mxu0 0.0
    %129 = vmatprep.subr.mxu0 0.0
    %130 = vmatpush2.msra.mxu0 0.0
    %131 = vmatprep.subr.mxu0 0.0
    %132 = vmatpush2.msra.mxu0 0.0
    %133 = vmatprep.subr.mxu0 0.0
    %134 = vmatpush2.msra.mxu0 0.0
    %135 = vmatprep.subr.mxu0 0.0
    %136 = vmatpush2.msra.mxu0 0.0
    %137 = vmatprep.subr.mxu0 0.0
    %138 = vmatpush2.msra.mxu0 0.0
    %139 = vmatprep.subr.mxu0 0.0
    %140 = vmatpush2.msra.mxu0 0.0
    %141 = vmatprep.subr.mxu0 0.0
    %142 = vmatpush2.msra.mxu0 0.0
    %143 = vmatprep.subr.mxu0 0.0
    %144 = vmatpush2.msra.mxu0 0.0
    %145 = vmatprep.subr.mxu0 0.0
    %146 = vmatpush2.msra.mxu0 0.0
    %147 = vmatprep.subr.mxu0 0.0
    %148 = vmatpush2.msra.mxu0 0.0
    %149 = vmatprep.subr.mxu0 0.0
    %150 = vmatpush2.msra.mxu0 0.0
    %151 = vmatprep.mubr.f32.mxu0 0.0
    %v152 = vand.u32 %v77, 4294901760
    %v153 = vsub.f32 %v77, %v152
    %v154 = vand.u32 %v153, 4294901760
    %v155 = vsub.f32 %v153, %v154
    %v156 = vand.u32 %v155, 4294901760
    %157 = vmatmul.mubr.f32.gmra.mxu0 %v156
    %v158 = vpop.f32.mrf.mxu0
    %v159 = vadd.f32 %v63, %v158
    %v160 = vpop.f32.mrf.mxu0
    %v161 = vadd.f32 %v67, %v160
    %162 = vdwg.mxu0
    %163 = vmatprep.subr.mxu0 0.0
    %164 = vmatpush1.msra.mxu0 0.0
    %165 = vmatprep.subr.mxu0 0.0
    %166 = vmatpush1.msra.mxu0 0.0
    %167 = vmatprep.subr.mxu0 0.0
    %168 = vmatpush1.msra.mxu0 0.0
    %169 = vmatprep.subr.mxu0 0.0
    %170 = vmatpush1.msra.mxu0 0.0
    %171 = vmatprep.subr.mxu0 0.0
    %172 = vmatpush1.msra.mxu0 0.0
    %173 = vmatprep.subr.mxu0 0.0
    %174 = vmatpush1.msra.mxu0 0.0
    %175 = vmatprep.subr.mxu0 0.0
    %176 = vmatpush1.msra.mxu0 0.0
    %177 = vmatprep.subr.mxu0 0.0
    %178 = vmatpush1.msra.mxu0 0.0
    %179 = vmatprep.subr.mxu0 0.0
    %180 = vmatpush1.msra.mxu0 0.0
    %181 = vmatprep.subr.mxu0 0.0
    %182 = vmatpush1.msra.mxu0 0.0
    %183 = vmatprep.subr.mxu0 0.0
    %184 = vmatpush1.msra.mxu0 0.0
    %185 = vmatprep.subr.mxu0 0.0
    %186 = vmatpush1.msra.mxu0 0.0
    %v187 = vand.u32 %v56, 4294901760
    %v188 = vsub.f32 %v56, %v187
    %v189 = vand.u32 %v188, 4294901760
    %v190 = vsub.f32 %v188, %v189
    %v191 = vand.u32 %v190, 4294901760
    %192 = vmatprep.subr.mxu0 %v191
    %v193 = vand.u32 %v55, 4294901760
    %v194 = vsub.f32 %v55, %v193
    %v195 = vand.u32 %v194, 4294901760
    %v196 = vsub.f32 %v194, %v195
    %v197 = vand.u32 %v196, 4294901760
    %198 = vmatpush1.msra.mxu0 %v197
    %v199 = vand.u32 %v53, 4294901760
    %v200 = vsub.f32 %v53, %v199
    %v201 = vand.u32 %v200, 4294901760
    %v202 = vsub.f32 %v200, %v201
    %v203 = vand.u32 %v202, 4294901760
    %204 = vmatprep.subr.mxu0 %v203
    %v205 = vand.u32 %v52, 4294901760
    %v206 = vsub.f32 %v52, %v205
    %v207 = vand.u32 %v206, 4294901760
    %v208 = vsub.f32 %v206, %v207
    %v209 = vand.u32 %v208, 4294901760
    %210 = vmatpush1.msra.mxu0 %v209
    %v211 = vand.u32 %v50, 4294901760
    %v212 = vsub.f32 %v50, %v211
    %v213 = vand.u32 %v212, 4294901760
    %v214 = vsub.f32 %v212, %v213
    %v215 = vand.u32 %v214, 4294901760
    %216 = vmatprep.subr.mxu0 %v215
    %v217 = vand.u32 %v49, 4294901760
    %v218 = vsub.f32 %v49, %v217
    %v219 = vand.u32 %v218, 4294901760
    %v220 = vsub.f32 %v218, %v219
    %v221 = vand.u32 %v220, 4294901760
    %222 = vmatpush1.msra.mxu0 %v221
    %v223 = vand.u32 %v47, 4294901760
    %v224 = vsub.f32 %v47, %v223
    %v225 = vand.u32 %v224, 4294901760
    %v226 = vsub.f32 %v224, %v225
    %v227 = vand.u32 %v226, 4294901760
    %228 = vmatprep.subr.mxu0 %v227
    %v229 = vand.u32 %v46, 4294901760
    %v230 = vsub.f32 %v46, %v229
    %v231 = vand.u32 %v230, 4294901760
    %v232 = vsub.f32 %v230, %v231
    %v233 = vand.u32 %v232, 4294901760
    %234 = vmatpush1.msra.mxu0 %v233
    %235 = vmatprep.subr.mxu0 0.0
    %236 = vmatpush2.msra.mxu0 0.0
    %237 = vmatprep.subr.mxu0 0.0
    %238 = vmatpush2.msra.mxu0 0.0
    %239 = vmatprep.subr.mxu0 0.0
    %240 = vmatpush2.msra.mxu0 0.0
    %241 = vmatprep.subr.mxu0 0.0
    %242 = vmatpush2.msra.mxu0 0.0
    %243 = vmatprep.subr.mxu0 0.0
    %244 = vmatpush2.msra.mxu0 0.0
    %245 = vmatprep.subr.mxu0 0.0
    %246 = vmatpush2.msra.mxu0 0.0
    %247 = vmatprep.subr.mxu0 0.0
    %248 = vmatpush2.msra.mxu0 0.0
    %249 = vmatprep.subr.mxu0 0.0
    %250 = vmatpush2.msra.mxu0 0.0
    %251 = vmatprep.subr.mxu0 0.0
    %252 = vmatpush2.msra.mxu0 0.0
    %253 = vmatprep.subr.mxu0 0.0
    %254 = vmatpush2.msra.mxu0 0.0
    %255 = vmatprep.subr.mxu0 0.0
    %256 = vmatpush2.msra.mxu0 0.0
    %257 = vmatprep.subr.mxu0 0.0
    %258 = vmatpush2.msra.mxu0 0.0
    %259 = vmatprep.subr.mxu0 0.0
    %260 = vmatpush2.msra.mxu0 0.0
    %261 = vmatprep.subr.mxu0 0.0
    %262 = vmatpush2.msra.mxu0 0.0
    %263 = vmatprep.subr.mxu0 0.0
    %264 = vmatpush2.msra.mxu0 0.0
    %265 = vmatprep.subr.mxu0 0.0
    %266 = vmatpush2.msra.mxu0 0.0
    %267 = vmatprep.mubr.f32.mxu0 0.0
    %v268 = vand.u32 %v77, 4294901760
    %269 = vmatmul.mubr.f32.gmra.mxu0 %v268
    %v270 = vpop.f32.mrf.mxu0
    %v271 = vadd.f32 %v159, %v270
    %v272 = vpop.f32.mrf.mxu0
    %v273 = vadd.f32 %v161, %v272
    %274 = vdwg.mxu0
    %275 = vmatprep.subr.mxu0 0.0
    %276 = vmatpush1.msra.mxu0 0.0
    %277 = vmatprep.subr.mxu0 0.0
    %278 = vmatpush1.msra.mxu0 0.0
    %279 = vmatprep.subr.mxu0 0.0
    %280 = vmatpush1.msra.mxu0 0.0
    %281 = vmatprep.subr.mxu0 0.0
    %282 = vmatpush1.msra.mxu0 0.0
    %283 = vmatprep.subr.mxu0 0.0
    %284 = vmatpush1.msra.mxu0 0.0
    %285 = vmatprep.subr.mxu0 0.0
    %286 = vmatpush1.msra.mxu0 0.0
    %287 = vmatprep.subr.mxu0 0.0
    %288 = vmatpush1.msra.mxu0 0.0
    %289 = vmatprep.subr.mxu0 0.0
    %290 = vmatpush1.msra.mxu0 0.0
    %291 = vmatprep.subr.mxu0 0.0
    %292 = vmatpush1.msra.mxu0 0.0
    %293 = vmatprep.subr.mxu0 0.0
    %294 = vmatpush1.msra.mxu0 0.0
    %295 = vmatprep.subr.mxu0 0.0
    %296 = vmatpush1.msra.mxu0 0.0
    %297 = vmatprep.subr.mxu0 0.0
    %298 = vmatpush1.msra.mxu0 0.0
    %v299 = vand.u32 %v56, 4294901760
    %v300 = vsub.f32 %v56, %v299
    %301 = vmatprep.subr.mxu0 %v300
    %v302 = vand.u32 %v55, 4294901760
    %v303 = vsub.f32 %v55, %v302
    %304 = vmatpush1.msra.mxu0 %v303
    %v305 = vand.u32 %v53, 4294901760
    %v306 = vsub.f32 %v53, %v305
    %307 = vmatprep.subr.mxu0 %v306
    %v308 = vand.u32 %v52, 4294901760
    %v309 = vsub.f32 %v52, %v308
    %310 = vmatpush1.msra.mxu0 %v309
    %v311 = vand.u32 %v50, 4294901760
    %v312 = vsub.f32 %v50, %v311
    %313 = vmatprep.subr.mxu0 %v312
    %v314 = vand.u32 %v49, 4294901760
    %v315 = vsub.f32 %v49, %v314
    %316 = vmatpush1.msra.mxu0 %v315
    %v317 = vand.u32 %v47, 4294901760
    %v318 = vsub.f32 %v47, %v317
    %319 = vmatprep.subr.mxu0 %v318
    %v320 = vand.u32 %v46, 4294901760
    %v321 = vsub.f32 %v46, %v320
    %322 = vmatpush1.msra.mxu0 %v321
    %323 = vmatprep.subr.mxu0 0.0
    %324 = vmatpush2.msra.mxu0 0.0
    %325 = vmatprep.subr.mxu0 0.0
    %326 = vmatpush2.msra.mxu0 0.0
    %327 = vmatprep.subr.mxu0 0.0
    %328 = vmatpush2.msra.mxu0 0.0
    %329 = vmatprep.subr.mxu0 0.0
    %330 = vmatpush2.msra.mxu0 0.0
    %331 = vmatprep.subr.mxu0 0.0
    %332 = vmatpush2.msra.mxu0 0.0
    %333 = vmatprep.subr.mxu0 0.0
    %334 = vmatpush2.msra.mxu0 0.0
    %335 = vmatprep.subr.mxu0 0.0
    %336 = vmatpush2.msra.mxu0 0.0
    %337 = vmatprep.subr.mxu0 0.0
    %338 = vmatpush2.msra.mxu0 0.0
    %339 = vmatprep.subr.mxu0 0.0
    %340 = vmatpush2.msra.mxu0 0.0
    %341 = vmatprep.subr.mxu0 0.0
    %342 = vmatpush2.msra.mxu0 0.0
    %343 = vmatprep.subr.mxu0 0.0
    %344 = vmatpush2.msra.mxu0 0.0
    %345 = vmatprep.subr.mxu0 0.0
    %346 = vmatpush2.msra.mxu0 0.0
    %347 = vmatprep.subr.mxu0 0.0
    %348 = vmatpush2.msra.mxu0 0.0
    %349 = vmatprep.subr.mxu0 0.0
    %350 = vmatpush2.msra.mxu0 0.0
    %351 = vmatprep.subr.mxu0 0.0
    %352 = vmatpush2.msra.mxu0 0.0
    %353 = vmatprep.subr.mxu0 0.0
    %354 = vmatpush2.msra.mxu0 0.0
    %355 = vmatprep.mubr.f32.mxu0 0.0
    %v356 = vand.u32 %v77, 4294901760
    %v357 = vsub.f32 %v77, %v356
    %358 = vmatmul.mubr.f32.gmra.mxu0 %v357
    %v359 = vpop.f32.mrf.mxu0
    %v360 = vadd.f32 %v271, %v359
    %v361 = vpop.f32.mrf.mxu0
    %v362 = vadd.f32 %v273, %v361
    %363 = vdwg.mxu0
    %364 = vmatprep.subr.mxu0 0.0
    %365 = vmatpush1.msra.mxu0 0.0
    %366 = vmatprep.subr.mxu0 0.0
    %367 = vmatpush1.msra.mxu0 0.0
    %368 = vmatprep.subr.mxu0 0.0
    %369 = vmatpush1.msra.mxu0 0.0
    %370 = vmatprep.subr.mxu0 0.0
    %371 = vmatpush1.msra.mxu0 0.0
    %372 = vmatprep.subr.mxu0 0.0
    %373 = vmatpush1.msra.mxu0 0.0
    %374 = vmatprep.subr.mxu0 0.0
    %375 = vmatpush1.msra.mxu0 0.0
    %376 = vmatprep.subr.mxu0 0.0
    %377 = vmatpush1.msra.mxu0 0.0
    %378 = vmatprep.subr.mxu0 0.0
    %379 = vmatpush1.msra.mxu0 0.0
    %380 = vmatprep.subr.mxu0 0.0
    %381 = vmatpush1.msra.mxu0 0.0
    %382 = vmatprep.subr.mxu0 0.0
    %383 = vmatpush1.msra.mxu0 0.0
    %384 = vmatprep.subr.mxu0 0.0
    %385 = vmatpush1.msra.mxu0 0.0
    %386 = vmatprep.subr.mxu0 0.0
    %387 = vmatpush1.msra.mxu0 0.0
    %v388 = vand.u32 %v56, 4294901760
    %389 = vmatprep.subr.mxu0 %v388
    %v390 = vand.u32 %v55, 4294901760
    %391 = vmatpush1.msra.mxu0 %v390
    %v392 = vand.u32 %v53, 4294901760
    %393 = vmatprep.subr.mxu0 %v392
    %v394 = vand.u32 %v52, 4294901760
    %395 = vmatpush1.msra.mxu0 %v394
    %v396 = vand.u32 %v50, 4294901760
    %397 = vmatprep.subr.mxu0 %v396
    %v398 = vand.u32 %v49, 4294901760
    %399 = vmatpush1.msra.mxu0 %v398
    %v400 = vand.u32 %v47, 4294901760
    %401 = vmatprep.subr.mxu0 %v400
    %v402 = vand.u32 %v46, 4294901760
    %403 = vmatpush1.msra.mxu0 %v402
    %404 = vmatprep.subr.mxu0 0.0
    %405 = vmatpush2.msra.mxu0 0.0
    %406 = vmatprep.subr.mxu0 0.0
    %407 = vmatpush2.msra.mxu0 0.0
    %408 = vmatprep.subr.mxu0 0.0
    %409 = vmatpush2.msra.mxu0 0.0
    %410 = vmatprep.subr.mxu0 0.0
    %411 = vmatpush2.msra.mxu0 0.0
    %412 = vmatprep.subr.mxu0 0.0
    %413 = vmatpush2.msra.mxu0 0.0
    %414 = vmatprep.subr.mxu0 0.0
    %415 = vmatpush2.msra.mxu0 0.0
    %416 = vmatprep.subr.mxu0 0.0
    %417 = vmatpush2.msra.mxu0 0.0
    %418 = vmatprep.subr.mxu0 0.0
    %419 = vmatpush2.msra.mxu0 0.0
    %420 = vmatprep.subr.mxu0 0.0
    %421 = vmatpush2.msra.mxu0 0.0
    %422 = vmatprep.subr.mxu0 0.0
    %423 = vmatpush2.msra.mxu0 0.0
    %424 = vmatprep.subr.mxu0 0.0
    %425 = vmatpush2.msra.mxu0 0.0
    %426 = vmatprep.subr.mxu0 0.0
    %427 = vmatpush2.msra.mxu0 0.0
    %428 = vmatprep.subr.mxu0 0.0
    %429 = vmatpush2.msra.mxu0 0.0
    %430 = vmatprep.subr.mxu0 0.0
    %431 = vmatpush2.msra.mxu0 0.0
    %432 = vmatprep.subr.mxu0 0.0
    %433 = vmatpush2.msra.mxu0 0.0
    %434 = vmatprep.subr.mxu0 0.0
    %435 = vmatpush2.msra.mxu0 0.0
    %436 = vmatprep.mubr.f32.mxu0 0.0
    %v437 = vand.u32 %v77, 4294901760
    %v438 = vsub.f32 %v77, %v437
    %v439 = vand.u32 %v438, 4294901760
    %440 = vmatmul.mubr.f32.gmra.mxu0 %v439
    %v441 = vpop.f32.mrf.mxu0
    %v442 = vadd.f32 %v360, %v441
    %v443 = vpop.f32.mrf.mxu0
    %v444 = vadd.f32 %v362, %v443
    %445 = vdwg.mxu0
    %446 = vmatprep.subr.mxu0 0.0
    %447 = vmatpush1.msra.mxu0 0.0
    %448 = vmatprep.subr.mxu0 0.0
    %449 = vmatpush1.msra.mxu0 0.0
    %450 = vmatprep.subr.mxu0 0.0
    %451 = vmatpush1.msra.mxu0 0.0
    %452 = vmatprep.subr.mxu0 0.0
    %453 = vmatpush1.msra.mxu0 0.0
    %454 = vmatprep.subr.mxu0 0.0
    %455 = vmatpush1.msra.mxu0 0.0
    %456 = vmatprep.subr.mxu0 0.0
    %457 = vmatpush1.msra.mxu0 0.0
    %458 = vmatprep.subr.mxu0 0.0
    %459 = vmatpush1.msra.mxu0 0.0
    %460 = vmatprep.subr.mxu0 0.0
    %461 = vmatpush1.msra.mxu0 0.0
    %462 = vmatprep.subr.mxu0 0.0
    %463 = vmatpush1.msra.mxu0 0.0
    %464 = vmatprep.subr.mxu0 0.0
    %465 = vmatpush1.msra.mxu0 0.0
    %466 = vmatprep.subr.mxu0 0.0
    %467 = vmatpush1.msra.mxu0 0.0
    %468 = vmatprep.subr.mxu0 0.0
    %469 = vmatpush1.msra.mxu0 0.0
    %v470 = vand.u32 %v56, 4294901760
    %v471 = vsub.f32 %v56, %v470
    %v472 = vand.u32 %v471, 4294901760
    %473 = vmatprep.subr.mxu0 %v472
    %v474 = vand.u32 %v55, 4294901760
    %v475 = vsub.f32 %v55, %v474
    %v476 = vand.u32 %v475, 4294901760
    %477 = vmatpush1.msra.mxu0 %v476
    %v478 = vand.u32 %v53, 4294901760
    %v479 = vsub.f32 %v53, %v478
    %v480 = vand.u32 %v479, 4294901760
    %481 = vmatprep.subr.mxu0 %v480
    %v482 = vand.u32 %v52, 4294901760
    %v483 = vsub.f32 %v52, %v482
    %v484 = vand.u32 %v483, 4294901760
    %485 = vmatpush1.msra.mxu0 %v484
    %v486 = vand.u32 %v50, 4294901760
    %v487 = vsub.f32 %v50, %v486
    %v488 = vand.u32 %v487, 4294901760
    %489 = vmatprep.subr.mxu0 %v488
    %v490 = vand.u32 %v49, 4294901760
    %v491 = vsub.f32 %v49, %v490
    %v492 = vand.u32 %v491, 4294901760
    %493 = vmatpush1.msra.mxu0 %v492
    %v494 = vand.u32 %v47, 4294901760
    %v495 = vsub.f32 %v47, %v494
    %v496 = vand.u32 %v495, 4294901760
    %497 = vmatprep.subr.mxu0 %v496
    %v498 = vand.u32 %v46, 4294901760
    %v499 = vsub.f32 %v46, %v498
    %v500 = vand.u32 %v499, 4294901760
    %501 = vmatpush1.msra.mxu0 %v500
    %502 = vmatprep.subr.mxu0 0.0
    %503 = vmatpush2.msra.mxu0 0.0
    %504 = vmatprep.subr.mxu0 0.0
    %505 = vmatpush2.msra.mxu0 0.0
    %506 = vmatprep.subr.mxu0 0.0
    %507 = vmatpush2.msra.mxu0 0.0
    %508 = vmatprep.subr.mxu0 0.0
    %509 = vmatpush2.msra.mxu0 0.0
    %510 = vmatprep.subr.mxu0 0.0
    %511 = vmatpush2.msra.mxu0 0.0
    %512 = vmatprep.subr.mxu0 0.0
    %513 = vmatpush2.msra.mxu0 0.0
    %514 = vmatprep.subr.mxu0 0.0
    %515 = vmatpush2.msra.mxu0 0.0
    %516 = vmatprep.subr.mxu0 0.0
    %517 = vmatpush2.msra.mxu0 0.0
    %518 = vmatprep.subr.mxu0 0.0
    %519 = vmatpush2.msra.mxu0 0.0
    %520 = vmatprep.subr.mxu0 0.0
    %521 = vmatpush2.msra.mxu0 0.0
    %522 = vmatprep.subr.mxu0 0.0
    %523 = vmatpush2.msra.mxu0 0.0
    %524 = vmatprep.subr.mxu0 0.0
    %525 = vmatpush2.msra.mxu0 0.0
    %526 = vmatprep.subr.mxu0 0.0
    %527 = vmatpush2.msra.mxu0 0.0
    %528 = vmatprep.subr.mxu0 0.0
    %529 = vmatpush2.msra.mxu0 0.0
    %530 = vmatprep.subr.mxu0 0.0
    %531 = vmatpush2.msra.mxu0 0.0
    %532 = vmatprep.subr.mxu0 0.0
    %533 = vmatpush2.msra.mxu0 0.0
    %534 = vmatprep.mubr.f32.mxu0 0.0
    %v535 = vand.u32 %v77, 4294901760
    %536 = vmatmul.mubr.f32.gmra.mxu0 %v535
    %v537 = vpop.f32.mrf.mxu0
    %v538 = vadd.f32 %v442, %v537
    %v539 = vpop.f32.mrf.mxu0
    %v540 = vadd.f32 %v444, %v539
    %541 = vdwg.mxu0
    %542 = vmatprep.subr.mxu0 0.0
    %543 = vmatpush1.msra.mxu0 0.0
    %544 = vmatprep.subr.mxu0 0.0
    %545 = vmatpush1.msra.mxu0 0.0
    %546 = vmatprep.subr.mxu0 0.0
    %547 = vmatpush1.msra.mxu0 0.0
    %548 = vmatprep.subr.mxu0 0.0
    %549 = vmatpush1.msra.mxu0 0.0
    %550 = vmatprep.subr.mxu0 0.0
    %551 = vmatpush1.msra.mxu0 0.0
    %552 = vmatprep.subr.mxu0 0.0
    %553 = vmatpush1.msra.mxu0 0.0
    %554 = vmatprep.subr.mxu0 0.0
    %555 = vmatpush1.msra.mxu0 0.0
    %556 = vmatprep.subr.mxu0 0.0
    %557 = vmatpush1.msra.mxu0 0.0
    %558 = vmatprep.subr.mxu0 0.0
    %559 = vmatpush1.msra.mxu0 0.0
    %560 = vmatprep.subr.mxu0 0.0
    %561 = vmatpush1.msra.mxu0 0.0
    %562 = vmatprep.subr.mxu0 0.0
    %563 = vmatpush1.msra.mxu0 0.0
    %564 = vmatprep.subr.mxu0 0.0
    %565 = vmatpush1.msra.mxu0 0.0
    %v566 = vand.u32 %v56, 4294901760
    %567 = vmatprep.subr.mxu0 %v566
    %v568 = vand.u32 %v55, 4294901760
    %569 = vmatpush1.msra.mxu0 %v568
    %v570 = vand.u32 %v53, 4294901760
    %571 = vmatprep.subr.mxu0 %v570
    %v572 = vand.u32 %v52, 4294901760
    %573 = vmatpush1.msra.mxu0 %v572
    %v574 = vand.u32 %v50, 4294901760
    %575 = vmatprep.subr.mxu0 %v574
    %v576 = vand.u32 %v49, 4294901760
    %577 = vmatpush1.msra.mxu0 %v576
    %v578 = vand.u32 %v47, 4294901760
    %579 = vmatprep.subr.mxu0 %v578
    %v580 = vand.u32 %v46, 4294901760
    %581 = vmatpush1.msra.mxu0 %v580
    %582 = vmatprep.subr.mxu0 0.0
    %583 = vmatpush2.msra.mxu0 0.0
    %584 = vmatprep.subr.mxu0 0.0
    %585 = vmatpush2.msra.mxu0 0.0
    %586 = vmatprep.subr.mxu0 0.0
    %587 = vmatpush2.msra.mxu0 0.0
    %588 = vmatprep.subr.mxu0 0.0
    %589 = vmatpush2.msra.mxu0 0.0
    %590 = vmatprep.subr.mxu0 0.0
    %591 = vmatpush2.msra.mxu0 0.0
    %592 = vmatprep.subr.mxu0 0.0
    %593 = vmatpush2.msra.mxu0 0.0
    %594 = vmatprep.subr.mxu0 0.0
    %595 = vmatpush2.msra.mxu0 0.0
    %596 = vmatprep.subr.mxu0 0.0
    %597 = vmatpush2.msra.mxu0 0.0
    %598 = vmatprep.subr.mxu0 0.0
    %599 = vmatpush2.msra.mxu0 0.0
    %600 = vmatprep.subr.mxu0 0.0
    %601 = vmatpush2.msra.mxu0 0.0
    %602 = vmatprep.subr.mxu0 0.0
    %603 = vmatpush2.msra.mxu0 0.0
    %604 = vmatprep.subr.mxu0 0.0
    %605 = vmatpush2.msra.mxu0 0.0
    %606 = vmatprep.subr.mxu0 0.0
    %607 = vmatpush2.msra.mxu0 0.0
    %608 = vmatprep.subr.mxu0 0.0
    %609 = vmatpush2.msra.mxu0 0.0
    %610 = vmatprep.subr.mxu0 0.0
    %611 = vmatpush2.msra.mxu0 0.0
    %612 = vmatprep.subr.mxu0 0.0
    %613 = vmatpush2.msra.mxu0 0.0
    %614 = vmatprep.mubr.f32.mxu0 0.0
    %v615 = vand.u32 %v77, 4294901760
    %616 = vmatmul.mubr.f32.gmra.mxu0 %v615
    %v617 = vpop.f32.mrf.mxu0
    %v618 = vadd.f32 %v538, %v617
    %v619 = vpop.f32.mrf.mxu0
    %v620 = vadd.f32 %v540, %v619
    %621 = vdwg.mxu0
    %622 = vmatprep.subr.mxu0 0.0
    %623 = vmatpush1.msra.mxu0 0.0
    %624 = vmatprep.subr.mxu0 0.0
    %625 = vmatpush1.msra.mxu0 0.0
    %626 = vmatprep.subr.mxu0 0.0
    %627 = vmatpush1.msra.mxu0 0.0
    %628 = vmatprep.subr.mxu0 0.0
    %629 = vmatpush1.msra.mxu0 0.0
    %630 = vmatprep.subr.mxu0 0.0
    %631 = vmatpush1.msra.mxu0 0.0
    %632 = vmatprep.subr.mxu0 0.0
    %633 = vmatpush1.msra.mxu0 0.0
    %634 = vmatprep.subr.mxu0 0.0
    %635 = vmatpush1.msra.mxu0 0.0
    %636 = vmatprep.subr.mxu0 0.0
    %637 = vmatpush1.msra.mxu0 0.0
    %638 = vmatprep.subr.mxu0 0.0
    %639 = vmatpush1.msra.mxu0 0.0
    %640 = vmatprep.subr.mxu0 0.0
    %641 = vmatpush1.msra.mxu0 0.0
    %642 = vmatprep.subr.mxu0 0.0
    %643 = vmatpush1.msra.mxu0 0.0
    %644 = vmatprep.subr.mxu0 0.0
    %645 = vmatpush1.msra.mxu0 0.0
    %646 = vmatprep.subr.mxu0 0.0
    %v647 = vand.u32 %v57, 4294901760
    %648 = vmatpush1.msra.mxu0 %v647
    %649 = vmatprep.subr.mxu0 0.0
    %v650 = vand.u32 %v54, 4294901760
    %651 = vmatpush1.msra.mxu0 %v650
    %652 = vmatprep.subr.mxu0 0.0
    %v653 = vand.u32 %v51, 4294901760
    %654 = vmatpush1.msra.mxu0 %v653
    %655 = vmatprep.subr.mxu0 0.0
    %v656 = vand.u32 %v48, 4294901760
    %657 = vmatpush1.msra.mxu0 %v656
    %658 = vmatprep.subr.mxu0 0.0
    %659 = vmatpush2.msra.mxu0 0.0
    %660 = vmatprep.subr.mxu0 0.0
    %661 = vmatpush2.msra.mxu0 0.0
    %662 = vmatprep.subr.mxu0 0.0
    %663 = vmatpush2.msra.mxu0 0.0
    %664 = vmatprep.subr.mxu0 0.0
    %665 = vmatpush2.msra.mxu0 0.0
    %666 = vmatprep.subr.mxu0 0.0
    %667 = vmatpush2.msra.mxu0 0.0
    %668 = vmatprep.subr.mxu0 0.0
    %669 = vmatpush2.msra.mxu0 0.0
    %670 = vmatprep.subr.mxu0 0.0
    %671 = vmatpush2.msra.mxu0 0.0
    %672 = vmatprep.subr.mxu0 0.0
    %673 = vmatpush2.msra.mxu0 0.0
    %674 = vmatprep.subr.mxu0 0.0
    %675 = vmatpush2.msra.mxu0 0.0
    %676 = vmatprep.subr.mxu0 0.0
    %677 = vmatpush2.msra.mxu0 0.0
    %678 = vmatprep.subr.mxu0 0.0
    %679 = vmatpush2.msra.mxu0 0.0
    %680 = vmatprep.subr.mxu0 0.0
    %681 = vmatpush2.msra.mxu0 0.0
    %682 = vmatprep.subr.mxu0 0.0
    %683 = vmatpush2.msra.mxu0 0.0
    %684 = vmatprep.subr.mxu0 0.0
    %685 = vmatpush2.msra.mxu0 0.0
    %686 = vmatprep.subr.mxu0 0.0
    %687 = vmatpush2.msra.mxu0 0.0
    %688 = vmatprep.subr.mxu0 0.0
    %689 = vmatpush2.msra.mxu0 0.0
    %690 = vmatprep.mubr.f32.mxu0 0.0
    %v691 = vand.u32 %v77, 4294901760
    %v692 = vsub.f32 %v77, %v691
    %v693 = vand.u32 %v692, 4294901760
    %v694 = vsub.f32 %v692, %v693
    %v695 = vand.u32 %v694, 4294901760
    %696 = vmatmul.mubr.f32.gmra.mxu0 %v695
    %v697 = vpop.f32.mrf.mxu0
    %v698 = vadd.f32 %v71, %v697
    %v699 = vpop.f32.mrf.mxu0
    %700 = vdwg.mxu0
    %701 = vmatprep.subr.mxu0 0.0
    %702 = vmatpush1.msra.mxu0 0.0
    %703 = vmatprep.subr.mxu0 0.0
    %704 = vmatpush1.msra.mxu0 0.0
    %705 = vmatprep.subr.mxu0 0.0
    %706 = vmatpush1.msra.mxu0 0.0
    %707 = vmatprep.subr.mxu0 0.0
    %708 = vmatpush1.msra.mxu0 0.0
    %709 = vmatprep.subr.mxu0 0.0
    %710 = vmatpush1.msra.mxu0 0.0
    %711 = vmatprep.subr.mxu0 0.0
    %712 = vmatpush1.msra.mxu0 0.0
    %713 = vmatprep.subr.mxu0 0.0
    %714 = vmatpush1.msra.mxu0 0.0
    %715 = vmatprep.subr.mxu0 0.0
    %716 = vmatpush1.msra.mxu0 0.0
    %717 = vmatprep.subr.mxu0 0.0
    %718 = vmatpush1.msra.mxu0 0.0
    %719 = vmatprep.subr.mxu0 0.0
    %720 = vmatpush1.msra.mxu0 0.0
    %721 = vmatprep.subr.mxu0 0.0
    %722 = vmatpush1.msra.mxu0 0.0
    %723 = vmatprep.subr.mxu0 0.0
    %724 = vmatpush1.msra.mxu0 0.0
    %725 = vmatprep.subr.mxu0 0.0
    %v726 = vand.u32 %v57, 4294901760
    %v727 = vsub.f32 %v57, %v726
    %v728 = vand.u32 %v727, 4294901760
    %v729 = vsub.f32 %v727, %v728
    %v730 = vand.u32 %v729, 4294901760
    %731 = vmatpush1.msra.mxu0 %v730
    %732 = vmatprep.subr.mxu0 0.0
    %v733 = vand.u32 %v54, 4294901760
    %v734 = vsub.f32 %v54, %v733
    %v735 = vand.u32 %v734, 4294901760
    %v736 = vsub.f32 %v734, %v735
    %v737 = vand.u32 %v736, 4294901760
    %738 = vmatpush1.msra.mxu0 %v737
    %739 = vmatprep.subr.mxu0 0.0
    %v740 = vand.u32 %v51, 4294901760
    %v741 = vsub.f32 %v51, %v740
    %v742 = vand.u32 %v741, 4294901760
    %v743 = vsub.f32 %v741, %v742
    %v744 = vand.u32 %v743, 4294901760
    %745 = vmatpush1.msra.mxu0 %v744
    %746 = vmatprep.subr.mxu0 0.0
    %v747 = vand.u32 %v48, 4294901760
    %v748 = vsub.f32 %v48, %v747
    %v749 = vand.u32 %v748, 4294901760
    %v750 = vsub.f32 %v748, %v749
    %v751 = vand.u32 %v750, 4294901760
    %752 = vmatpush1.msra.mxu0 %v751
    %753 = vmatprep.subr.mxu0 0.0
    %754 = vmatpush2.msra.mxu0 0.0
    %755 = vmatprep.subr.mxu0 0.0
    %756 = vmatpush2.msra.mxu0 0.0
    %757 = vmatprep.subr.mxu0 0.0
    %758 = vmatpush2.msra.mxu0 0.0
    %759 = vmatprep.subr.mxu0 0.0
    %760 = vmatpush2.msra.mxu0 0.0
    %761 = vmatprep.subr.mxu0 0.0
    %762 = vmatpush2.msra.mxu0 0.0
    %763 = vmatprep.subr.mxu0 0.0
    %764 = vmatpush2.msra.mxu0 0.0
    %765 = vmatprep.subr.mxu0 0.0
    %766 = vmatpush2.msra.mxu0 0.0
    %767 = vmatprep.subr.mxu0 0.0
    %768 = vmatpush2.msra.mxu0 0.0
    %769 = vmatprep.subr.mxu0 0.0
    %770 = vmatpush2.msra.mxu0 0.0
    %771 = vmatprep.subr.mxu0 0.0
    %772 = vmatpush2.msra.mxu0 0.0
    %773 = vmatprep.subr.mxu0 0.0
    %774 = vmatpush2.msra.mxu0 0.0
    %775 = vmatprep.subr.mxu0 0.0
    %776 = vmatpush2.msra.mxu0 0.0
    %777 = vmatprep.subr.mxu0 0.0
    %778 = vmatpush2.msra.mxu0 0.0
    %779 = vmatprep.subr.mxu0 0.0
    %780 = vmatpush2.msra.mxu0 0.0
    %781 = vmatprep.subr.mxu0 0.0
    %782 = vmatpush2.msra.mxu0 0.0
    %783 = vmatprep.subr.mxu0 0.0
    %784 = vmatpush2.msra.mxu0 0.0
    %785 = vmatprep.mubr.f32.mxu0 0.0
    %v786 = vand.u32 %v77, 4294901760
    %787 = vmatmul.mubr.f32.gmra.mxu0 %v786
    %v788 = vpop.f32.mrf.mxu0
    %v789 = vadd.f32 %v698, %v788
    %v790 = vpop.f32.mrf.mxu0
    %791 = vdwg.mxu0
    %792 = vmatprep.subr.mxu0 0.0
    %793 = vmatpush1.msra.mxu0 0.0
    %794 = vmatprep.subr.mxu0 0.0
    %795 = vmatpush1.msra.mxu0 0.0
    %796 = vmatprep.subr.mxu0 0.0
    %797 = vmatpush1.msra.mxu0 0.0
    %798 = vmatprep.subr.mxu0 0.0
    %799 = vmatpush1.msra.mxu0 0.0
    %800 = vmatprep.subr.mxu0 0.0
    %801 = vmatpush1.msra.mxu0 0.0
    %802 = vmatprep.subr.mxu0 0.0
    %803 = vmatpush1.msra.mxu0 0.0
    %804 = vmatprep.subr.mxu0 0.0
    %805 = vmatpush1.msra.mxu0 0.0
    %806 = vmatprep.subr.mxu0 0.0
    %807 = vmatpush1.msra.mxu0 0.0
    %808 = vmatprep.subr.mxu0 0.0
    %809 = vmatpush1.msra.mxu0 0.0
    %810 = vmatprep.subr.mxu0 0.0
    %811 = vmatpush1.msra.mxu0 0.0
    %812 = vmatprep.subr.mxu0 0.0
    %813 = vmatpush1.msra.mxu0 0.0
    %814 = vmatprep.subr.mxu0 0.0
    %815 = vmatpush1.msra.mxu0 0.0
    %816 = vmatprep.subr.mxu0 0.0
    %v817 = vand.u32 %v57, 4294901760
    %v818 = vsub.f32 %v57, %v817
    %819 = vmatpush1.msra.mxu0 %v818
    %820 = vmatprep.subr.mxu0 0.0
    %v821 = vand.u32 %v54, 4294901760
    %v822 = vsub.f32 %v54, %v821
    %823 = vmatpush1.msra.mxu0 %v822
    %824 = vmatprep.subr.mxu0 0.0
    %v825 = vand.u32 %v51, 4294901760
    %v826 = vsub.f32 %v51, %v825
    %827 = vmatpush1.msra.mxu0 %v826
    %828 = vmatprep.subr.mxu0 0.0
    %v829 = vand.u32 %v48, 4294901760
    %v830 = vsub.f32 %v48, %v829
    %831 = vmatpush1.msra.mxu0 %v830
    %832 = vmatprep.subr.mxu0 0.0
    %833 = vmatpush2.msra.mxu0 0.0
    %834 = vmatprep.subr.mxu0 0.0
    %835 = vmatpush2.msra.mxu0 0.0
    %836 = vmatprep.subr.mxu0 0.0
    %837 = vmatpush2.msra.mxu0 0.0
    %838 = vmatprep.subr.mxu0 0.0
    %839 = vmatpush2.msra.mxu0 0.0
    %840 = vmatprep.subr.mxu0 0.0
    %841 = vmatpush2.msra.mxu0 0.0
    %842 = vmatprep.subr.mxu0 0.0
    %843 = vmatpush2.msra.mxu0 0.0
    %844 = vmatprep.subr.mxu0 0.0
    %845 = vmatpush2.msra.mxu0 0.0
    %846 = vmatprep.subr.mxu0 0.0
    %847 = vmatpush2.msra.mxu0 0.0
    %848 = vmatprep.subr.mxu0 0.0
    %849 = vmatpush2.msra.mxu0 0.0
    %850 = vmatprep.subr.mxu0 0.0
    %851 = vmatpush2.msra.mxu0 0.0
    %852 = vmatprep.subr.mxu0 0.0
    %853 = vmatpush2.msra.mxu0 0.0
    %854 = vmatprep.subr.mxu0 0.0
    %855 = vmatpush2.msra.mxu0 0.0
    %856 = vmatprep.subr.mxu0 0.0
    %857 = vmatpush2.msra.mxu0 0.0
    %858 = vmatprep.subr.mxu0 0.0
    %859 = vmatpush2.msra.mxu0 0.0
    %860 = vmatprep.subr.mxu0 0.0
    %861 = vmatpush2.msra.mxu0 0.0
    %862 = vmatprep.subr.mxu0 0.0
    %863 = vmatpush2.msra.mxu0 0.0
    %864 = vmatprep.mubr.f32.mxu0 0.0
    %v865 = vand.u32 %v77, 4294901760
    %v866 = vsub.f32 %v77, %v865
    %867 = vmatmul.mubr.f32.gmra.mxu0 %v866
    %v868 = vpop.f32.mrf.mxu0
    %v869 = vadd.f32 %v789, %v868
    %v870 = vpop.f32.mrf.mxu0
    %871 = vdwg.mxu0
    %872 = vmatprep.subr.mxu0 0.0
    %873 = vmatpush1.msra.mxu0 0.0
    %874 = vmatprep.subr.mxu0 0.0
    %875 = vmatpush1.msra.mxu0 0.0
    %876 = vmatprep.subr.mxu0 0.0
    %877 = vmatpush1.msra.mxu0 0.0
    %878 = vmatprep.subr.mxu0 0.0
    %879 = vmatpush1.msra.mxu0 0.0
    %880 = vmatprep.subr.mxu0 0.0
    %881 = vmatpush1.msra.mxu0 0.0
    %882 = vmatprep.subr.mxu0 0.0
    %883 = vmatpush1.msra.mxu0 0.0
    %884 = vmatprep.subr.mxu0 0.0
    %885 = vmatpush1.msra.mxu0 0.0
    %886 = vmatprep.subr.mxu0 0.0
    %887 = vmatpush1.msra.mxu0 0.0
    %888 = vmatprep.subr.mxu0 0.0
    %889 = vmatpush1.msra.mxu0 0.0
    %890 = vmatprep.subr.mxu0 0.0
    %891 = vmatpush1.msra.mxu0 0.0
    %892 = vmatprep.subr.mxu0 0.0
    %893 = vmatpush1.msra.mxu0 0.0
    %894 = vmatprep.subr.mxu0 0.0
    %895 = vmatpush1.msra.mxu0 0.0
    %896 = vmatprep.subr.mxu0 0.0
    %v897 = vand.u32 %v57, 4294901760
    %898 = vmatpush1.msra.mxu0 %v897
    %899 = vmatprep.subr.mxu0 0.0
    %v900 = vand.u32 %v54, 4294901760
    %901 = vmatpush1.msra.mxu0 %v900
    %902 = vmatprep.subr.mxu0 0.0
    %v903 = vand.u32 %v51, 4294901760
    %904 = vmatpush1.msra.mxu0 %v903
    %905 = vmatprep.subr.mxu0 0.0
    %v906 = vand.u32 %v48, 4294901760
    %907 = vmatpush1.msra.mxu0 %v906
    %908 = vmatprep.subr.mxu0 0.0
    %909 = vmatpush2.msra.mxu0 0.0
    %910 = vmatprep.subr.mxu0 0.0
    %911 = vmatpush2.msra.mxu0 0.0
    %912 = vmatprep.subr.mxu0 0.0
    %913 = vmatpush2.msra.mxu0 0.0
    %914 = vmatprep.subr.mxu0 0.0
    %915 = vmatpush2.msra.mxu0 0.0
    %916 = vmatprep.subr.mxu0 0.0
    %917 = vmatpush2.msra.mxu0 0.0
    %918 = vmatprep.subr.mxu0 0.0
    %919 = vmatpush2.msra.mxu0 0.0
    %920 = vmatprep.subr.mxu0 0.0
    %921 = vmatpush2.msra.mxu0 0.0
    %922 = vmatprep.subr.mxu0 0.0
    %923 = vmatpush2.msra.mxu0 0.0
    %924 = vmatprep.subr.mxu0 0.0
    %925 = vmatpush2.msra.mxu0 0.0
    %926 = vmatprep.subr.mxu0 0.0
    %927 = vmatpush2.msra.mxu0 0.0
    %928 = vmatprep.subr.mxu0 0.0
    %929 = vmatpush2.msra.mxu0 0.0
    %930 = vmatprep.subr.mxu0 0.0
    %931 = vmatpush2.msra.mxu0 0.0
    %932 = vmatprep.subr.mxu0 0.0
    %933 = vmatpush2.msra.mxu0 0.0
    %934 = vmatprep.subr.mxu0 0.0
    %935 = vmatpush2.msra.mxu0 0.0
    %936 = vmatprep.subr.mxu0 0.0
    %937 = vmatpush2.msra.mxu0 0.0
    %938 = vmatprep.subr.mxu0 0.0
    %939 = vmatpush2.msra.mxu0 0.0
    %940 = vmatprep.mubr.f32.mxu0 0.0
    %v941 = vand.u32 %v77, 4294901760
    %v942 = vsub.f32 %v77, %v941
    %v943 = vand.u32 %v942, 4294901760
    %944 = vmatmul.mubr.f32.gmra.mxu0 %v943
    %v945 = vpop.f32.mrf.mxu0
    %v946 = vadd.f32 %v869, %v945
    %v947 = vpop.f32.mrf.mxu0
    %948 = vdwg.mxu0
    %949 = vmatprep.subr.mxu0 0.0
    %950 = vmatpush1.msra.mxu0 0.0
    %951 = vmatprep.subr.mxu0 0.0
    %952 = vmatpush1.msra.mxu0 0.0
    %953 = vmatprep.subr.mxu0 0.0
    %954 = vmatpush1.msra.mxu0 0.0
    %955 = vmatprep.subr.mxu0 0.0
    %956 = vmatpush1.msra.mxu0 0.0
    %957 = vmatprep.subr.mxu0 0.0
    %958 = vmatpush1.msra.mxu0 0.0
    %959 = vmatprep.subr.mxu0 0.0
    %960 = vmatpush1.msra.mxu0 0.0
    %961 = vmatprep.subr.mxu0 0.0
    %962 = vmatpush1.msra.mxu0 0.0
    %963 = vmatprep.subr.mxu0 0.0
    %964 = vmatpush1.msra.mxu0 0.0
    %965 = vmatprep.subr.mxu0 0.0
    %966 = vmatpush1.msra.mxu0 0.0
    %967 = vmatprep.subr.mxu0 0.0
    %968 = vmatpush1.msra.mxu0 0.0
    %969 = vmatprep.subr.mxu0 0.0
    %970 = vmatpush1.msra.mxu0 0.0
    %971 = vmatprep.subr.mxu0 0.0
    %972 = vmatpush1.msra.mxu0 0.0
    %973 = vmatprep.subr.mxu0 0.0
    %v974 = vand.u32 %v57, 4294901760
    %v975 = vsub.f32 %v57, %v974
    %v976 = vand.u32 %v975, 4294901760
    %977 = vmatpush1.msra.mxu0 %v976
    %978 = vmatprep.subr.mxu0 0.0
    %v979 = vand.u32 %v54, 4294901760
    %v980 = vsub.f32 %v54, %v979
    %v981 = vand.u32 %v980, 4294901760
    %982 = vmatpush1.msra.mxu0 %v981
    %983 = vmatprep.subr.mxu0 0.0
    %v984 = vand.u32 %v51, 4294901760
    %v985 = vsub.f32 %v51, %v984
    %v986 = vand.u32 %v985, 4294901760
    %987 = vmatpush1.msra.mxu0 %v986
    %988 = vmatprep.subr.mxu0 0.0
    %v989 = vand.u32 %v48, 4294901760
    %v990 = vsub.f32 %v48, %v989
    %v991 = vand.u32 %v990, 4294901760
    %992 = vmatpush1.msra.mxu0 %v991
    %993 = vmatprep.subr.mxu0 0.0
    %994 = vmatpush2.msra.mxu0 0.0
    %995 = vmatprep.subr.mxu0 0.0
    %996 = vmatpush2.msra.mxu0 0.0
    %997 = vmatprep.subr.mxu0 0.0
    %998 = vmatpush2.msra.mxu0 0.0
    %999 = vmatprep.subr.mxu0 0.0
    %1000 = vmatpush2.msra.mxu0 0.0
    %1001 = vmatprep.subr.mxu0 0.0
    %1002 = vmatpush2.msra.mxu0 0.0
    %1003 = vmatprep.subr.mxu0 0.0
    %1004 = vmatpush2.msra.mxu0 0.0
    %1005 = vmatprep.subr.mxu0 0.0
    %1006 = vmatpush2.msra.mxu0 0.0
    %1007 = vmatprep.subr.mxu0 0.0
    %1008 = vmatpush2.msra.mxu0 0.0
    %1009 = vmatprep.subr.mxu0 0.0
    %1010 = vmatpush2.msra.mxu0 0.0
    %1011 = vmatprep.subr.mxu0 0.0
    %1012 = vmatpush2.msra.mxu0 0.0
    %1013 = vmatprep.subr.mxu0 0.0
    %1014 = vmatpush2.msra.mxu0 0.0
    %1015 = vmatprep.subr.mxu0 0.0
    %1016 = vmatpush2.msra.mxu0 0.0
    %1017 = vmatprep.subr.mxu0 0.0
    %1018 = vmatpush2.msra.mxu0 0.0
    %1019 = vmatprep.subr.mxu0 0.0
    %1020 = vmatpush2.msra.mxu0 0.0
    %1021 = vmatprep.subr.mxu0 0.0
    %1022 = vmatpush2.msra.mxu0 0.0
    %1023 = vmatprep.subr.mxu0 0.0
    %1024 = vmatpush2.msra.mxu0 0.0
    %1025 = vmatprep.mubr.f32.mxu0 0.0
    %v1026 = vand.u32 %v77, 4294901760
    %1027 = vmatmul.mubr.f32.gmra.mxu0 %v1026
    %v1028 = vpop.f32.mrf.mxu0
    %v1029 = vadd.f32 %v946, %v1028
    %v1030 = vpop.f32.mrf.mxu0
    %1031 = vdwg.mxu0
    %1032 = vmatprep.subr.mxu0 0.0
    %1033 = vmatpush1.msra.mxu0 0.0
    %1034 = vmatprep.subr.mxu0 0.0
    %1035 = vmatpush1.msra.mxu0 0.0
    %1036 = vmatprep.subr.mxu0 0.0
    %1037 = vmatpush1.msra.mxu0 0.0
    %1038 = vmatprep.subr.mxu0 0.0
    %1039 = vmatpush1.msra.mxu0 0.0
    %1040 = vmatprep.subr.mxu0 0.0
    %1041 = vmatpush1.msra.mxu0 0.0
    %1042 = vmatprep.subr.mxu0 0.0
    %1043 = vmatpush1.msra.mxu0 0.0
    %1044 = vmatprep.subr.mxu0 0.0
    %1045 = vmatpush1.msra.mxu0 0.0
    %1046 = vmatprep.subr.mxu0 0.0
    %1047 = vmatpush1.msra.mxu0 0.0
    %1048 = vmatprep.subr.mxu0 0.0
    %1049 = vmatpush1.msra.mxu0 0.0
    %1050 = vmatprep.subr.mxu0 0.0
    %1051 = vmatpush1.msra.mxu0 0.0
    %1052 = vmatprep.subr.mxu0 0.0
    %1053 = vmatpush1.msra.mxu0 0.0
    %1054 = vmatprep.subr.mxu0 0.0
    %1055 = vmatpush1.msra.mxu0 0.0
    %1056 = vmatprep.subr.mxu0 0.0
    %v1057 = vand.u32 %v57, 4294901760
    %1058 = vmatpush1.msra.mxu0 %v1057
    %1059 = vmatprep.subr.mxu0 0.0
    %v1060 = vand.u32 %v54, 4294901760
    %1061 = vmatpush1.msra.mxu0 %v1060
    %1062 = vmatprep.subr.mxu0 0.0
    %v1063 = vand.u32 %v51, 4294901760
    %1064 = vmatpush1.msra.mxu0 %v1063
    %1065 = vmatprep.subr.mxu0 0.0
    %v1066 = vand.u32 %v48, 4294901760
    %1067 = vmatpush1.msra.mxu0 %v1066
    %1068 = vmatprep.subr.mxu0 0.0
    %1069 = vmatpush2.msra.mxu0 0.0
    %1070 = vmatprep.subr.mxu0 0.0
    %1071 = vmatpush2.msra.mxu0 0.0
    %1072 = vmatprep.subr.mxu0 0.0
    %1073 = vmatpush2.msra.mxu0 0.0
    %1074 = vmatprep.subr.mxu0 0.0
    %1075 = vmatpush2.msra.mxu0 0.0
    %1076 = vmatprep.subr.mxu0 0.0
    %1077 = vmatpush2.msra.mxu0 0.0
    %1078 = vmatprep.subr.mxu0 0.0
    %1079 = vmatpush2.msra.mxu0 0.0
    %1080 = vmatprep.subr.mxu0 0.0
    %1081 = vmatpush2.msra.mxu0 0.0
    %1082 = vmatprep.subr.mxu0 0.0
    %1083 = vmatpush2.msra.mxu0 0.0
    %1084 = vmatprep.subr.mxu0 0.0
    %1085 = vmatpush2.msra.mxu0 0.0
    %1086 = vmatprep.subr.mxu0 0.0
    %1087 = vmatpush2.msra.mxu0 0.0
    %1088 = vmatprep.subr.mxu0 0.0
    %1089 = vmatpush2.msra.mxu0 0.0
    %1090 = vmatprep.subr.mxu0 0.0
    %1091 = vmatpush2.msra.mxu0 0.0
    %1092 = vmatprep.subr.mxu0 0.0
    %1093 = vmatpush2.msra.mxu0 0.0
    %1094 = vmatprep.subr.mxu0 0.0
    %1095 = vmatpush2.msra.mxu0 0.0
    %1096 = vmatprep.subr.mxu0 0.0
    %1097 = vmatpush2.msra.mxu0 0.0
    %1098 = vmatprep.subr.mxu0 0.0
    %1099 = vmatpush2.msra.mxu0 0.0
    %1100 = vmatprep.mubr.f32.mxu0 0.0
    %v1101 = vand.u32 %v77, 4294901760
    %1102 = vmatmul.mubr.f32.gmra.mxu0 %v1101
    %v1103 = vpop.f32.mrf.mxu0
    %v1104 = vadd.f32 %v1029, %v1103
    %v1105 = vpop.f32.mrf.mxu0
    %1106 = vdwg.mxu0
    %1107 = vst [vmem:[#allocation7] sm:$0xff] %v618
    %1108 = vst [vmem:[#allocation8] sm:$0xff] %v620
    %1109 = vst.msk [vmem:[#allocation10] sm:$0xff] %vm75, %v1104
    // Predicated region
    $region22: #{tpu_custom_call.1} parent=1 // pred_check
      _
    $region23: #{tpu_custom_call.1} parent=1 // pred_check_branch
      %1111 = sbr.rel (0) target = $region25
    $region24: #{tpu_custom_call.1} parent=1 // pred_region
      %s1113 = ssub.s32 128, 128
      %1114 = vsyncadd [#allocation4], %s1113
      %s1116 = sshll.u32 [#allocation7], 4
      %s1117 = int_to_ptr.vmem [resolvable:$true] %s1116
      %1119 = dma.vmem_to_hbm [thread:$0]  %s1117, 128, %s3, [#allocation4]
    $region25: #{tpu_custom_call.1} parent=1 // pred_fallthru
      _
    // Predicated region
    $region26: #{tpu_custom_call.1} parent=1 // pred_check
      _
    $region27: #{tpu_custom_call.1} parent=1 // pred_check_branch
      %1121 = sbr.rel (0) target = $region29
    $region28: #{tpu_custom_call.1} parent=1 // pred_region
      %s1123 = ssub.s32 128, 128
      %1124 = vsyncadd [#allocation9], %s1123
      %s1126 = sshll.u32 [#allocation8], 4
      %s1127 = int_to_ptr.vmem [resolvable:$true] %s1126
      %1129 = dma.vmem_to_hbm [thread:$0]  %s1127, 128, %s4, [#allocation9]
    $region29: #{tpu_custom_call.1} parent=1 // pred_fallthru
      _
    // Predicated region
    $region30: #{tpu_custom_call.1} parent=1 // pred_check
      _
    $region31: #{tpu_custom_call.1} parent=1 // pred_check_branch
      %1131 = sbr.rel (0) target = $region33
    $region32: #{tpu_custom_call.1} parent=1 // pred_region
      %s1133 = ssub.s32 128, 128
      %1134 = vsyncadd [#allocation9], %s1133
      %s1136 = sshll.u32 [#allocation10], 4
      %s1137 = int_to_ptr.vmem [resolvable:$true] %s1136
      %1139 = dma.vmem_to_hbm [thread:$0]  %s1137, 128, %s5, [#allocation9]
    $region33: #{tpu_custom_call.1} parent=1 // pred_fallthru
      _
    // Predicated region
    $region34: #{tpu_custom_call.1} parent=1 // pred_check
      _
    $region35: #{tpu_custom_call.1} parent=1 // pred_check_branch
      %1141 = sbr.rel (0) target = $region37
    $region36: #{tpu_custom_call.1} parent=1 // pred_region
      %1142 = dma.done [#allocation4], 128
    $region37: #{tpu_custom_call.1} parent=1 // pred_fallthru
      _
    // Predicated region
    $region38: #{tpu_custom_call.1} parent=1 // pred_check
      _
    $region39: #{tpu_custom_call.1} parent=1 // pred_check_branch
      %1144 = sbr.rel (0) target = $region41
    $region40: #{tpu_custom_call.1} parent=1 // pred_region
      %1145 = dma.done [#allocation9], 128
    $region41: #{tpu_custom_call.1} parent=1 // pred_fallthru
      _
    // Predicated region
    $region42: #{tpu_custom_call.1} parent=1 // pred_check
      _
    $region43: #{tpu_custom_call.1} parent=1 // pred_check_branch
      %1147 = sbr.rel (0) target = $region45
    $region44: #{tpu_custom_call.1} parent=1 // pred_region
      %1148 = dma.done [#allocation9], 128
    $region45: #{tpu_custom_call.1} parent=1 // pred_fallthru
      _
    %1149 = vsyncpa [#allocation3], 1
    %1150 = vsyncpa [#allocation6], 1
    %1151 = vsyncpa [#allocation4], 1
    %1152 = vsyncpa [#allocation9], 1

</llo_original>
